<compile_context>
chip_gen: v7x
topology: tpu7x:2x2x1
jax: 0.10.0
libtpu: 0.0.40
codegen_flags: <defaults>
</compile_context>

<pallas_src>
import jax
import jax.numpy as jnp
from jax.experimental import pallas as pl
from jax.experimental.pallas import tpu as pltpu


def mlp_kernel(x_ref, w1_ref, w2_ref, w3_ref, o_ref):
    # x_ref : (4, tb)   rows 0..2 = features (batch on lanes), row 3 = 1.0
    # w1_ref: (65, 4)   rows 0..63 = [W1 | b1], row 64 = [0, 0, 0, 1]
    # w2_ref: (33, 65)  rows 0..31 = [W2 | b2], row 32 = [0, ..., 0, 1]
    # w3_ref: (1, 33)   [W3 | b3]
    x = x_ref[...]

    # Layer 1 on the MXU (K=3+1 padded is fine; MXU slot has huge slack).
    # Row 64 of h1 is relu(1.0) == 1.0 -> carries the ones row for layer 2.
    h1 = jnp.maximum(
        jnp.dot(w1_ref[...], x, preferred_element_type=jnp.float32), 0.0)   # (65, tb)

    # Layer 2 on the MXU, bias folded in via the ones row.
    h2 = jnp.maximum(
        jnp.dot(w2_ref[...], h1, preferred_element_type=jnp.float32), 0.0)  # (33, tb)

    # Layer 3 on the MXU (M=1), bias folded in via h2's ones row.
    y = jnp.dot(w3_ref[...], h2, preferred_element_type=jnp.float32)        # (1, tb)

    o_ref[...] = y.astype(o_ref.dtype)  # lane-dense store


def _round_up(n, m):
    return ((n + m - 1) // m) * m


def _is_v7x():
    try:
        kind = jax.devices()[0].device_kind.lower()
    except Exception:
        return False
    return "v7" in kind or "7x" in kind


def mlp_forward(x, w1_aug, w2_aug, w3_aug, *, tb=8192):
    """x: (B, 3) float32. Returns (B, 1) float32.

    Params (K-augmented kernel layout, see pack_params):
      w1_aug (65, 4), w2_aug (33, 65), w3_aug (1, 33)
    """
    B, F = x.shape
    assert F == 3
    x = x.astype(jnp.float32)

    # Lane-dense batch tile (multiple of 128), capped so small batches don't
    # pad to a full default tile (B=200 -> tile 256, not 8192).
    b128 = _round_up(B, 128)
    tb = max(128, (tb // 128) * 128)
    tb = min(tb, b128)
    # Only v7x has 2 TensorCores sharding the "parallel" axis: keep >= 2 grid
    # steps there when the batch allows. On v5e/v6e a bigger tile is better
    # (per-grid-step overhead ~0.35 us is comparable to the per-tile work).
    if _is_v7x() and b128 >= 256:
        tb = min(tb, max(128, (b128 // 2 // 128) * 128))

    grid = pl.cdiv(B, tb)
    B_pad = grid * tb

    # Batch-on-lanes layout with the bias row fused in: transpose once, then a
    # SINGLE pad with constant 1.0 appends both the ones row (K-augmentation
    # for the bias folds) and the batch padding in one pass. Padded batch
    # columns are all-ones -> harmless garbage rows sliced off at the end.
    x_aug = jnp.pad(x.T, ((0, 1), (0, B_pad - B)), constant_values=1.0)  # (4, B_pad)

    full = lambda a: pl.BlockSpec(a.shape, lambda i: (0,) * a.ndim)

    # Advisory cost estimate. NOTE: this kernel is compute / grid-step-overhead
    # bound, NOT HBM bound (only ~20 B of HBM traffic per batch row).
    n_param = w1_aug.size + w2_aug.size + w3_aug.size
    cost = pl.CostEstimate(
        flops=2 * B_pad * (4 * 65 + 65 * 33 + 33),
        transcendentals=0,
        bytes_accessed=4 * (5 * B_pad + n_param),
    )

    # Rough per-tile VMEM footprint: double-buffered x/out tiles + h1/h2
    # temporaries + resident weights. Only override the scoped-VMEM limit if a
    # very large tb was requested (matters on v5e's 16 MiB default).
    vmem_bytes = 4 * (2 * (4 + 1) * tb + (65 + 33) * tb + n_param) + (1 << 20)
    cparams = dict(dimension_semantics=("parallel",))
    if vmem_bytes > 12 * 1024 * 1024:
        cparams["vmem_limit_bytes"] = min(2 * vmem_bytes, 64 * 1024 * 1024)

    out = pl.pallas_call(
        mlp_kernel,
        out_shape=jax.ShapeDtypeStruct((1, B_pad), jnp.float32),
        grid_spec=pltpu.PrefetchScalarGridSpec(
            num_scalar_prefetch=0,
            grid=(grid,),
            in_specs=[
                pl.BlockSpec((4, tb), lambda i: (0, i)),    # x tile (lane-dense)
                full(w1_aug), full(w2_aug), full(w3_aug),   # VMEM-resident weights
            ],
            out_specs=pl.BlockSpec((1, tb), lambda i: (0, i)),  # lane-dense out
        ),
        compiler_params=pltpu.CompilerParams(**cparams),
        cost_estimate=cost,
    )(x_aug, w1_aug, w2_aug, w3_aug)

    # (1, B_pad) -> (B_pad, 1) is a free reshape of the same flat buffer.
    return out.reshape(B_pad, 1)[:B]


def pack_params(w1, b1, w2, b2, w3, b3):
    """PyTorch nn.Linear layout -> K-augmented kernel layout.

    Inputs: w1 (64,3), b1 (64,), w2 (32,64), b2 (32,), w3 (1,32), b3 (1,).
    Returns: w1_aug (65,4), w2_aug (33,65), w3_aug (1,33).
    """
    f32 = jnp.float32
    w1 = jnp.asarray(w1, f32); b1 = jnp.asarray(b1, f32).reshape(64, 1)
    w2 = jnp.asarray(w2, f32); b2 = jnp.asarray(b2, f32).reshape(32, 1)
    w3 = jnp.asarray(w3, f32); b3 = jnp.asarray(b3, f32).reshape(1, 1)

    ones_row1 = jnp.concatenate([jnp.zeros((1, 3), f32), jnp.ones((1, 1), f32)], axis=1)
    w1_aug = jnp.concatenate(
        [jnp.concatenate([w1, b1], axis=1), ones_row1], axis=0)           # (65, 4)

    ones_row2 = jnp.concatenate([jnp.zeros((1, 64), f32), jnp.ones((1, 1), f32)], axis=1)
    w2_aug = jnp.concatenate(
        [jnp.concatenate([w2, b2], axis=1), ones_row2], axis=0)           # (33, 65)

    w3_aug = jnp.concatenate([w3, b3], axis=1)                            # (1, 33)
    return w1_aug, w2_aug, w3_aug


def init_params(key):
    """Deterministic init matching nn.Linear default init (PyTorch layout)."""
    k1, k2, k3, k4, k5, k6 = jax.random.split(key, 6)

    def linear(kw, kb, fan_in, fan_out):
        bound = 1.0 / jnp.sqrt(fan_in)
        w = jax.random.uniform(kw, (fan_out, fan_in), jnp.float32, -bound, bound)
        b = jax.random.uniform(kb, (fan_out,), jnp.float32, -bound, bound)
        return w, b

    w1, b1 = linear(k1, k2, 3, 64)     # (64, 3), (64,)
    w2, b2 = linear(k3, k4, 64, 32)    # (32, 64), (32,)
    w3, b3 = linear(k5, k6, 32, 1)     # (1, 32), (1,)
    return w1, b1, w2, b2, w3, b3


def reference_forward(x, w1, b1, w2, b2, w3, b3):
    h1 = jnp.maximum(x @ w1.T + b1, 0.0)   # (B, 64)
    h2 = jnp.maximum(h1 @ w2.T + b2, 0.0)  # (B, 32)
    return h2 @ w3.T + b3                  # (B, 1)


if __name__ == "__main__":
    key = jax.random.PRNGKey(0)
    kx, kx2, kp = jax.random.split(key, 3)
    torch_params = init_params(kp)
    params = pack_params(*torch_params)

    # Tile-aligned batch.
    B = 1024
    x = jax.random.normal(kx, (B, 3), dtype=jnp.float32)
    out = jax.block_until_ready(mlp_forward(x, *params))
    ref = reference_forward(x, *torch_params)
    assert out.shape == (B, 1)
    assert jnp.allclose(out, ref, atol=1e-4, rtol=1e-4), "mismatch vs reference (B=1024)"

    # Ragged small batch (exercises the small-batch tile cap + padding path).
    B2 = 200
    x2 = jax.random.normal(kx2, (B2, 3), dtype=jnp.float32)
    out2 = jax.block_until_ready(mlp_forward(x2, *params))
    ref2 = reference_forward(x2, *torch_params)
    assert out2.shape == (B2, 1)
    assert jnp.allclose(out2, ref2, atol=1e-4, rtol=1e-4), "mismatch vs reference (B=200)"

    print("KERNEL_OK")
</pallas_src>

<mosaic_0001>
module attributes {stable_mosaic.version = 11 : i64} {
  func.func @mlp_kernel(%arg0: i32, %arg1: memref<4x1024xf32, #tpu.memory_space<vmem>>, %arg2: memref<65x4xf32, #tpu.memory_space<vmem>>, %arg3: memref<33x65xf32, #tpu.memory_space<vmem>>, %arg4: memref<1x33xf32, #tpu.memory_space<vmem>>, %arg5: memref<1x1024xf32, #tpu.memory_space<vmem>>) attributes {dimension_semantics = [#tpu.dimension_semantics<parallel>], iteration_bounds = array<i64: 1>, scalar_prefetch = 0 : i64, scratch_operands = 0 : i64, tpu.core_type = #tpu.core_type<tc>, window_params = [{transform_indices = @transform_0, window_bounds = array<i64: 4, 1024>}, {pipeline_mode = #tpu.pipeline_mode<synchronous>, transform_indices = @transform_1, window_bounds = array<i64: 65, 4>}, {pipeline_mode = #tpu.pipeline_mode<synchronous>, transform_indices = @transform_2, window_bounds = array<i64: 33, 65>}, {pipeline_mode = #tpu.pipeline_mode<synchronous>, transform_indices = @transform_3, window_bounds = array<i64: 1, 33>}, {transform_indices = @transform_4, window_bounds = array<i64: 1, 1024>}]} {
    %c0 = arith.constant 0 : index
    %c0_0 = arith.constant 0 : index
    %0 = vector.load %arg1[%c0, %c0_0] : memref<4x1024xf32, #tpu.memory_space<vmem>>, vector<4x1024xf32>
    %c0_1 = arith.constant 0 : index
    %c0_2 = arith.constant 0 : index
    %1 = vector.load %arg2[%c0_1, %c0_2] : memref<65x4xf32, #tpu.memory_space<vmem>>, vector<65x4xf32>
    %cst = arith.constant dense<0.000000e+00> : vector<65x1024xf32>
    %2 = tpu.matmul %1, %0, %cst {dimension_numbers = #tpu.dot_dimension_numbers<[1], [0], [0], [1], [0, 0, 1, 1], [], []>} : vector<65x4xf32>, vector<4x1024xf32>, vector<65x1024xf32> -> vector<65x1024xf32>
    %cst_3 = arith.constant 0.000000e+00 : f32
    %3 = vector.broadcast %cst_3 : f32 to vector<65x1024xf32>
    %4 = arith.maximumf %2, %3 : vector<65x1024xf32>
    %c0_4 = arith.constant 0 : index
    %c0_5 = arith.constant 0 : index
    %5 = vector.load %arg3[%c0_4, %c0_5] : memref<33x65xf32, #tpu.memory_space<vmem>>, vector<33x65xf32>
    %cst_6 = arith.constant dense<0.000000e+00> : vector<33x1024xf32>
    %6 = tpu.matmul %5, %4, %cst_6 {dimension_numbers = #tpu.dot_dimension_numbers<[1], [0], [0], [1], [0, 0, 1, 1], [], []>} : vector<33x65xf32>, vector<65x1024xf32>, vector<33x1024xf32> -> vector<33x1024xf32>
    %cst_7 = arith.constant 0.000000e+00 : f32
    %7 = vector.broadcast %cst_7 : f32 to vector<33x1024xf32>
    %8 = arith.maximumf %6, %7 : vector<33x1024xf32>
    %c0_8 = arith.constant 0 : index
    %c0_9 = arith.constant 0 : index
    %9 = vector.load %arg4[%c0_8, %c0_9] : memref<1x33xf32, #tpu.memory_space<vmem>>, vector<1x33xf32>
    %cst_10 = arith.constant dense<0.000000e+00> : vector<1x1024xf32>
    %10 = tpu.matmul %9, %8, %cst_10 {dimension_numbers = #tpu.dot_dimension_numbers<[1], [0], [0], [1], [0, 0, 1, 1], [], []>} : vector<1x33xf32>, vector<33x1024xf32>, vector<1x1024xf32> -> vector<1x1024xf32>
    %c0_11 = arith.constant 0 : index
    %c0_12 = arith.constant 0 : index
    %11 = vector.load %arg5[%c0_11, %c0_12] : memref<1x1024xf32, #tpu.memory_space<vmem>>, vector<1x1024xf32>
    tpu.vector_store %arg5[%c0_11, %c0_12], %10 {strides = array<i32>} : memref<1x1024xf32, #tpu.memory_space<vmem>>, vector<1x1024xf32>,
    return
  }
  func.func @transform_0(%arg0: i32) -> (i32, i32) {
    %c0_i32 = arith.constant 0 : i32
    %c0_i32_0 = arith.constant 0 : i32
    return %c0_i32, %arg0 : i32, i32
  }
  func.func @transform_1(%arg0: i32) -> (i32, i32) {
    %c0_i32 = arith.constant 0 : i32
    %c0_i32_0 = arith.constant 0 : i32
    %c0_i32_1 = arith.constant 0 : i32
    return %c0_i32, %c0_i32_0 : i32, i32
  }
  func.func @transform_2(%arg0: i32) -> (i32, i32) {
    %c0_i32 = arith.constant 0 : i32
    %c0_i32_0 = arith.constant 0 : i32
    %c0_i32_1 = arith.constant 0 : i32
    return %c0_i32, %c0_i32_0 : i32, i32
  }
  func.func @transform_3(%arg0: i32) -> (i32, i32) {
    %c0_i32 = arith.constant 0 : i32
    %c0_i32_0 = arith.constant 0 : i32
    %c0_i32_1 = arith.constant 0 : i32
    return %c0_i32, %c0_i32_0 : i32, i32
  }
  func.func @transform_4(%arg0: i32) -> (i32, i32) {
    %c0_i32 = arith.constant 0 : i32
    %c0_i32_0 = arith.constant 0 : i32
    return %c0_i32, %arg0 : i32, i32
  }
}

</mosaic_0001>

<llo_original>
// kernel: tpu_custom_call.1
$region0: #{tpu_custom_call.1}
  #allocation0 [shape = 'u32[]', space=smem, size = 0x4, offset = 0x4, fixed_abs, tag = 'smem constant byte address 0x4 - core index']
  #allocation1 [shape = 'u32[144,128]{1,0:T(1,128)}', space=vmem, size = 0x12000, scoped, tag = 'internal scratch']
  %s0 = inlined_call_operand.vmem [shape: f32[4,1024], index: 0, kind: input, shape index: {}]
  %s1 = inlined_call_operand.vmem [shape: f32[65,4], index: 1, kind: input, shape index: {}]
  %s2 = inlined_call_operand.vmem [shape: f32[33,65], index: 2, kind: input, shape index: {}]
  %s3 = inlined_call_operand.vmem [shape: f32[1,33], index: 3, kind: input, shape index: {}]
  %s4 = inlined_call_operand.hbm [shape: f32[1,1024], index: 4, kind: output, shape index: {}]
  %s5 = sld [smem:[#allocation0]]
  $region26: #{tpu_custom_call.1} parent=0
    _
  %s7 = ssub.s32 1, %s5
  %s8 = scalar_select 0, %s7, %s5
  $region1: #{tpu_custom_call.1} parent=0
    #allocation2 [shape = 'u8[4096]{0}', space=vmem, size = 0x1000, scoped, tag = 'output window, operand 0, single buffered']
    #allocation3 [shape = 's32[1]{0}', space=sflag, size = 0x4, scoped, tag = 'scoped memory for tpu_custom_call.1']
    %9 = vsyncpa [#allocation3], 0
    // Predicated region
    $region2: #{tpu_custom_call.1} parent=1 // pred_check
      _
    $region3: #{tpu_custom_call.1} parent=1 // pred_check_branch
      %11 = sbr.rel (0) target = $region5
    $region4: #{tpu_custom_call.1} parent=1 // pred_region
      _
    $region5: #{tpu_custom_call.1} parent=1 // pred_fallthru
      _
    // Predicated region
    $region6: #{tpu_custom_call.1} parent=1 // pred_check
      _
    $region7: #{tpu_custom_call.1} parent=1 // pred_check_branch
      %13 = sbr.rel (0) target = $region9
    $region8: #{tpu_custom_call.1} parent=1 // pred_region
      _
    $region9: #{tpu_custom_call.1} parent=1 // pred_fallthru
      _
    // Predicated region
    $region10: #{tpu_custom_call.1} parent=1 // pred_check
      _
    $region11: #{tpu_custom_call.1} parent=1 // pred_check_branch
      %15 = sbr.rel (0) target = $region13
    $region12: #{tpu_custom_call.1} parent=1 // pred_region
      _
    $region13: #{tpu_custom_call.1} parent=1 // pred_fallthru
      _
    // Predicated region
    $region14: #{tpu_custom_call.1} parent=1 // pred_check
      _
    $region15: #{tpu_custom_call.1} parent=1 // pred_check_branch
      %17 = sbr.rel (0) target = $region17
    $region16: #{tpu_custom_call.1} parent=1 // pred_region
      _
    $region17: #{tpu_custom_call.1} parent=1 // pred_fallthru
      _
    %v18 = vld [vmem:[%s0] sm:$0xff]
    %v19 = vld [vmem:[%s0 + $0x8] sm:$0xff]
    %v20 = vld [vmem:[%s0 + $0x10] sm:$0xff]
    %v21 = vld [vmem:[%s0 + $0x18] sm:$0xff]
    %v22 = vld [vmem:[%s1] sm:$0xff]
    %v23 = vld [vmem:[%s1 + $0x8] sm:$0xff]
    %v24 = vld [vmem:[%s1 + $0x10] sm:$0xff]
    %v25 = vld [vmem:[%s1 + $0x18] sm:$0xff]
    %v26 = vld [vmem:[%s1 + $0x20] sm:$0xff]
    %v27 = vld [vmem:[%s1 + $0x28] sm:$0xff]
    %v28 = vld [vmem:[%s1 + $0x30] sm:$0xff]
    %v29 = vld [vmem:[%s1 + $0x38] sm:$0xff]
    %v30 = vld [vmem:[%s1 + $0x40] sm:$0x1]
    %v35 = vcombine.high %v18, %v18
    %v36 = vcombine.high %v19, %v19
    %v37 = vcombine.high %v20, %v20
    %v38 = vcombine.high %v21, %v21
    %vm39 = vcmask 31744
    %v41 = vsel %vm39, %v22, 0
    %v44 = vsel %vm39, %v23, 0
    %v47 = vsel %vm39, %v24, 0
    %v50 = vsel %vm39, %v25, 0
    %v53 = vsel %vm39, %v26, 0
    %v56 = vsel %vm39, %v27, 0
    %v59 = vsel %vm39, %v28, 0
    %v62 = vsel %vm39, %v29, 0
    %v65 = vsel %vm39, %v30, 0
    %vm67 = vcmask 1043456
    %v68 = vsel %vm67, %v18, 0
    %v70 = vsel %vm67, %v35, 0
    %v72 = vsel %vm67, %v19, 0
    %v74 = vsel %vm67, %v36, 0
    %v76 = vsel %vm67, %v20, 0
    %v78 = vsel %vm67, %v37, 0
    %v80 = vsel %vm67, %v21, 0
    %v82 = vsel %vm67, %v38, 0
    %84 = vmatprep.subr.mxu0 %v70
    %85 = vmatpush1.msra.mxu0 %v68
    %86 = vmatprep.subr.mxu0 0.0
    %87 = vmatpush1.msra.mxu0 0.0
    %88 = vmatprep.subr.mxu0 0.0
    %89 = vmatpush1.msra.mxu0 0.0
    %90 = vmatprep.subr.mxu0 0.0
    %91 = vmatpush1.msra.mxu0 0.0
    %92 = vmatprep.subr.mxu0 0.0
    %93 = vmatpush1.msra.mxu0 0.0
    %94 = vmatprep.subr.mxu0 0.0
    %95 = vmatpush1.msra.mxu0 0.0
    %96 = vmatprep.subr.mxu0 0.0
    %97 = vmatpush1.msra.mxu0 0.0
    %98 = vmatprep.subr.mxu0 0.0
    %99 = vmatpush1.msra.mxu0 0.0
    %100 = vmatprep.subr.mxu0 0.0
    %101 = vmatpush1.msra.mxu0 0.0
    %102 = vmatprep.subr.mxu0 0.0
    %103 = vmatpush1.msra.mxu0 0.0
    %104 = vmatprep.subr.mxu0 0.0
    %105 = vmatpush1.msra.mxu0 0.0
    %106 = vmatprep.subr.mxu0 0.0
    %107 = vmatpush1.msra.mxu0 0.0
    %108 = vmatprep.subr.mxu0 0.0
    %109 = vmatpush1.msra.mxu0 0.0
    %110 = vmatprep.subr.mxu0 0.0
    %111 = vmatpush1.msra.mxu0 0.0
    %112 = vmatprep.subr.mxu0 0.0
    %113 = vmatpush1.msra.mxu0 0.0
    %114 = vmatprep.subr.mxu0 0.0
    %115 = vmatpush1.msra.mxu0 0.0
    %116 = vmatprep.subr.mxu0 0.0
    %117 = vmatpush1.msra.mxu0 0.0
    %118 = vmatprep.subr.mxu0 0.0
    %119 = vmatpush1.msra.mxu0 0.0
    %120 = vmatprep.subr.mxu0 0.0
    %121 = vmatpush1.msra.mxu0 0.0
    %122 = vmatprep.subr.mxu0 0.0
    %123 = vmatpush1.msra.mxu0 0.0
    %124 = vmatprep.subr.mxu0 0.0
    %125 = vmatpush1.msra.mxu0 0.0
    %126 = vmatprep.subr.mxu0 0.0
    %127 = vmatpush1.msra.mxu0 0.0
    %128 = vmatprep.subr.mxu0 0.0
    %129 = vmatpush1.msra.mxu0 0.0
    %130 = vmatprep.subr.mxu0 0.0
    %131 = vmatpush1.msra.mxu0 0.0
    %132 = vmatprep.subr.mxu0 0.0
    %133 = vmatpush1.msra.mxu0 0.0
    %134 = vmatprep.subr.mxu0 0.0
    %135 = vmatpush1.msra.mxu0 0.0
    %136 = vmatprep.subr.mxu0 0.0
    %137 = vmatpush1.msra.mxu0 0.0
    %138 = vmatprep.subr.mxu0 0.0
    %139 = vmatpush1.msra.mxu0 0.0
    %140 = vmatprep.subr.mxu0 0.0
    %141 = vmatpush1.msra.mxu0 0.0
    %142 = vmatprep.subr.mxu0 0.0
    %143 = vmatpush1.msra.mxu0 0.0
    %144 = vmatprep.subr.mxu0 0.0
    %145 = vmatpush1.msra.mxu0 0.0
    %146 = vmatprep.subr.mxu0 0.0
    %147 = vmatpush1.msra.mxu0 0.0
    %148 = vmatprep.mubr.f32.mxu0 0.0
    %149 = vmatmul.mubr.f32.gmra.mrb[0].mxu0 %v41
    %v150 = vpop.f32.mrb[0].mxu0
    %v151 = vadd.f32 0.0, %v150
    %v152 = vpop.f32.mrb[0].mxu0
    %v153 = vadd.f32 0.0, %v152
    %154 = vmatprep.mubr.f32.mxu0 0.0
    %155 = vmatmul.mubr.f32.gmra.mrb[0].mxu0 %v44
    %v156 = vpop.f32.mrb[0].mxu0
    %v157 = vadd.f32 0.0, %v156
    %v158 = vpop.f32.mrb[0].mxu0
    %v159 = vadd.f32 0.0, %v158
    %160 = vmatprep.mubr.f32.mxu0 0.0
    %161 = vmatmul.mubr.f32.gmra.mrb[0].mxu0 %v47
    %v162 = vpop.f32.mrb[0].mxu0
    %v163 = vadd.f32 0.0, %v162
    %v164 = vpop.f32.mrb[0].mxu0
    %v165 = vadd.f32 0.0, %v164
    %166 = vmatprep.mubr.f32.mxu0 0.0
    %167 = vmatmul.mubr.f32.gmra.mrb[0].mxu0 %v50
    %v168 = vpop.f32.mrb[0].mxu0
    %v169 = vadd.f32 0.0, %v168
    %v170 = vpop.f32.mrb[0].mxu0
    %v171 = vadd.f32 0.0, %v170
    %172 = vmatprep.mubr.f32.mxu0 0.0
    %173 = vmatmul.mubr.f32.gmra.mrb[0].mxu0 %v53
    %v174 = vpop.f32.mrb[0].mxu0
    %v175 = vadd.f32 0.0, %v174
    %v176 = vpop.f32.mrb[0].mxu0
    %v177 = vadd.f32 0.0, %v176
    %178 = vmatprep.mubr.f32.mxu0 0.0
    %179 = vmatmul.mubr.f32.gmra.mrb[0].mxu0 %v56
    %v180 = vpop.f32.mrb[0].mxu0
    %v181 = vadd.f32 0.0, %v180
    %v182 = vpop.f32.mrb[0].mxu0
    %v183 = vadd.f32 0.0, %v182
    %184 = vmatprep.mubr.f32.mxu0 0.0
    %185 = vmatmul.mubr.f32.gmra.mrb[0].mxu0 %v59
    %v186 = vpop.f32.mrb[0].mxu0
    %v187 = vadd.f32 0.0, %v186
    %v188 = vpop.f32.mrb[0].mxu0
    %v189 = vadd.f32 0.0, %v188
    %190 = vmatprep.mubr.f32.mxu0 0.0
    %191 = vmatmul.mubr.f32.gmra.mrb[0].mxu0 %v62
    %v192 = vpop.f32.mrb[0].mxu0
    %v193 = vadd.f32 0.0, %v192
    %v194 = vpop.f32.mrb[0].mxu0
    %v195 = vadd.f32 0.0, %v194
    %196 = vmatprep.mubr.f32.mxu0 0.0
    %197 = vmatmul.mubr.f32.gmra.mrb[0].mxu0 %v65
    %v198 = vpop.f32.mrb[0].mxu0
    %v199 = vadd.f32 0.0, %v198
    %v200 = vpop.f32.mrb[0].mxu0
    %v201 = vadd.f32 0.0, %v200
    %202 = vdwg.mxu0
    %203 = vmatprep.subr.mxu0 %v74
    %204 = vmatpush1.msra.mxu0 %v72
    %205 = vmatprep.subr.mxu0 0.0
    %206 = vmatpush1.msra.mxu0 0.0
    %207 = vmatprep.subr.mxu0 0.0
    %208 = vmatpush1.msra.mxu0 0.0
    %209 = vmatprep.subr.mxu0 0.0
    %210 = vmatpush1.msra.mxu0 0.0
    %211 = vmatprep.subr.mxu0 0.0
    %212 = vmatpush1.msra.mxu0 0.0
    %213 = vmatprep.subr.mxu0 0.0
    %214 = vmatpush1.msra.mxu0 0.0
    %215 = vmatprep.subr.mxu0 0.0
    %216 = vmatpush1.msra.mxu0 0.0
    %217 = vmatprep.subr.mxu0 0.0
    %218 = vmatpush1.msra.mxu0 0.0
    %219 = vmatprep.subr.mxu0 0.0
    %220 = vmatpush1.msra.mxu0 0.0
    %221 = vmatprep.subr.mxu0 0.0
    %222 = vmatpush1.msra.mxu0 0.0
    %223 = vmatprep.subr.mxu0 0.0
    %224 = vmatpush1.msra.mxu0 0.0
    %225 = vmatprep.subr.mxu0 0.0
    %226 = vmatpush1.msra.mxu0 0.0
    %227 = vmatprep.subr.mxu0 0.0
    %228 = vmatpush1.msra.mxu0 0.0
    %229 = vmatprep.subr.mxu0 0.0
    %230 = vmatpush1.msra.mxu0 0.0
    %231 = vmatprep.subr.mxu0 0.0
    %232 = vmatpush1.msra.mxu0 0.0
    %233 = vmatprep.subr.mxu0 0.0
    %234 = vmatpush1.msra.mxu0 0.0
    %235 = vmatprep.subr.mxu0 0.0
    %236 = vmatpush1.msra.mxu0 0.0
    %237 = vmatprep.subr.mxu0 0.0
    %238 = vmatpush1.msra.mxu0 0.0
    %239 = vmatprep.subr.mxu0 0.0
    %240 = vmatpush1.msra.mxu0 0.0
    %241 = vmatprep.subr.mxu0 0.0
    %242 = vmatpush1.msra.mxu0 0.0
    %243 = vmatprep.subr.mxu0 0.0
    %244 = vmatpush1.msra.mxu0 0.0
    %245 = vmatprep.subr.mxu0 0.0
    %246 = vmatpush1.msra.mxu0 0.0
    %247 = vmatprep.subr.mxu0 0.0
    %248 = vmatpush1.msra.mxu0 0.0
    %249 = vmatprep.subr.mxu0 0.0
    %250 = vmatpush1.msra.mxu0 0.0
    %251 = vmatprep.subr.mxu0 0.0
    %252 = vmatpush1.msra.mxu0 0.0
    %253 = vmatprep.subr.mxu0 0.0
    %254 = vmatpush1.msra.mxu0 0.0
    %255 = vmatprep.subr.mxu0 0.0
    %256 = vmatpush1.msra.mxu0 0.0
    %257 = vmatprep.subr.mxu0 0.0
    %258 = vmatpush1.msra.mxu0 0.0
    %259 = vmatprep.subr.mxu0 0.0
    %260 = vmatpush1.msra.mxu0 0.0
    %261 = vmatprep.subr.mxu0 0.0
    %262 = vmatpush1.msra.mxu0 0.0
    %263 = vmatprep.subr.mxu0 0.0
    %264 = vmatpush1.msra.mxu0 0.0
    %265 = vmatprep.subr.mxu0 0.0
    %266 = vmatpush1.msra.mxu0 0.0
    %267 = vmatprep.mubr.f32.mxu0 0.0
    %268 = vmatmul.mubr.f32.gmra.mrb[0].mxu0 %v41
    %v269 = vpop.f32.mrb[0].mxu0
    %v270 = vadd.f32 0.0, %v269
    %v271 = vpop.f32.mrb[0].mxu0
    %v272 = vadd.f32 0.0, %v271
    %273 = vmatprep.mubr.f32.mxu0 0.0
    %274 = vmatmul.mubr.f32.gmra.mrb[0].mxu0 %v44
    %v275 = vpop.f32.mrb[0].mxu0
    %v276 = vadd.f32 0.0, %v275
    %v277 = vpop.f32.mrb[0].mxu0
    %v278 = vadd.f32 0.0, %v277
    %279 = vmatprep.mubr.f32.mxu0 0.0
    %280 = vmatmul.mubr.f32.gmra.mrb[0].mxu0 %v47
    %v281 = vpop.f32.mrb[0].mxu0
    %v282 = vadd.f32 0.0, %v281
    %v283 = vpop.f32.mrb[0].mxu0
    %v284 = vadd.f32 0.0, %v283
    %285 = vmatprep.mubr.f32.mxu0 0.0
    %286 = vmatmul.mubr.f32.gmra.mrb[0].mxu0 %v50
    %v287 = vpop.f32.mrb[0].mxu0
    %v288 = vadd.f32 0.0, %v287
    %v289 = vpop.f32.mrb[0].mxu0
    %v290 = vadd.f32 0.0, %v289
    %291 = vmatprep.mubr.f32.mxu0 0.0
    %292 = vmatmul.mubr.f32.gmra.mrb[0].mxu0 %v53
    %v293 = vpop.f32.mrb[0].mxu0
    %v294 = vadd.f32 0.0, %v293
    %v295 = vpop.f32.mrb[0].mxu0
    %v296 = vadd.f32 0.0, %v295
    %297 = vmatprep.mubr.f32.mxu0 0.0
    %298 = vmatmul.mubr.f32.gmra.mrb[0].mxu0 %v56
    %v299 = vpop.f32.mrb[0].mxu0
    %v300 = vadd.f32 0.0, %v299
    %v301 = vpop.f32.mrb[0].mxu0
    %v302 = vadd.f32 0.0, %v301
    %303 = vmatprep.mubr.f32.mxu0 0.0
    %304 = vmatmul.mubr.f32.gmra.mrb[0].mxu0 %v59
    %v305 = vpop.f32.mrb[0].mxu0
    %v306 = vadd.f32 0.0, %v305
    %v307 = vpop.f32.mrb[0].mxu0
    %v308 = vadd.f32 0.0, %v307
    %309 = vmatprep.mubr.f32.mxu0 0.0
    %310 = vmatmul.mubr.f32.gmra.mrb[0].mxu0 %v62
    %v311 = vpop.f32.mrb[0].mxu0
    %v312 = vadd.f32 0.0, %v311
    %v313 = vpop.f32.mrb[0].mxu0
    %v314 = vadd.f32 0.0, %v313
    %315 = vmatprep.mubr.f32.mxu0 0.0
    %316 = vmatmul.mubr.f32.gmra.mrb[0].mxu0 %v65
    %v317 = vpop.f32.mrb[0].mxu0
    %v318 = vadd.f32 0.0, %v317
    %v319 = vpop.f32.mrb[0].mxu0
    %v320 = vadd.f32 0.0, %v319
    %321 = vdwg.mxu0
    %322 = vmatprep.subr.mxu0 %v78
    %323 = vmatpush1.msra.mxu0 %v76
    %324 = vmatprep.subr.mxu0 0.0
    %325 = vmatpush1.msra.mxu0 0.0
    %326 = vmatprep.subr.mxu0 0.0
    %327 = vmatpush1.msra.mxu0 0.0
    %328 = vmatprep.subr.mxu0 0.0
    %329 = vmatpush1.msra.mxu0 0.0
    %330 = vmatprep.subr.mxu0 0.0
    %331 = vmatpush1.msra.mxu0 0.0
    %332 = vmatprep.subr.mxu0 0.0
    %333 = vmatpush1.msra.mxu0 0.0
    %334 = vmatprep.subr.mxu0 0.0
    %335 = vmatpush1.msra.mxu0 0.0
    %336 = vmatprep.subr.mxu0 0.0
    %337 = vmatpush1.msra.mxu0 0.0
    %338 = vmatprep.subr.mxu0 0.0
    %339 = vmatpush1.msra.mxu0 0.0
    %340 = vmatprep.subr.mxu0 0.0
    %341 = vmatpush1.msra.mxu0 0.0
    %342 = vmatprep.subr.mxu0 0.0
    %343 = vmatpush1.msra.mxu0 0.0
    %344 = vmatprep.subr.mxu0 0.0
    %345 = vmatpush1.msra.mxu0 0.0
    %346 = vmatprep.subr.mxu0 0.0
    %347 = vmatpush1.msra.mxu0 0.0
    %348 = vmatprep.subr.mxu0 0.0
    %349 = vmatpush1.msra.mxu0 0.0
    %350 = vmatprep.subr.mxu0 0.0
    %351 = vmatpush1.msra.mxu0 0.0
    %352 = vmatprep.subr.mxu0 0.0
    %353 = vmatpush1.msra.mxu0 0.0
    %354 = vmatprep.subr.mxu0 0.0
    %355 = vmatpush1.msra.mxu0 0.0
    %356 = vmatprep.subr.mxu0 0.0
    %357 = vmatpush1.msra.mxu0 0.0
    %358 = vmatprep.subr.mxu0 0.0
    %359 = vmatpush1.msra.mxu0 0.0
    %360 = vmatprep.subr.mxu0 0.0
    %361 = vmatpush1.msra.mxu0 0.0
    %362 = vmatprep.subr.mxu0 0.0
    %363 = vmatpush1.msra.mxu0 0.0
    %364 = vmatprep.subr.mxu0 0.0
    %365 = vmatpush1.msra.mxu0 0.0
    %366 = vmatprep.subr.mxu0 0.0
    %367 = vmatpush1.msra.mxu0 0.0
    %368 = vmatprep.subr.mxu0 0.0
    %369 = vmatpush1.msra.mxu0 0.0
    %370 = vmatprep.subr.mxu0 0.0
    %371 = vmatpush1.msra.mxu0 0.0
    %372 = vmatprep.subr.mxu0 0.0
    %373 = vmatpush1.msra.mxu0 0.0
    %374 = vmatprep.subr.mxu0 0.0
    %375 = vmatpush1.msra.mxu0 0.0
    %376 = vmatprep.subr.mxu0 0.0
    %377 = vmatpush1.msra.mxu0 0.0
    %378 = vmatprep.subr.mxu0 0.0
    %379 = vmatpush1.msra.mxu0 0.0
    %380 = vmatprep.subr.mxu0 0.0
    %381 = vmatpush1.msra.mxu0 0.0
    %382 = vmatprep.subr.mxu0 0.0
    %383 = vmatpush1.msra.mxu0 0.0
    %384 = vmatprep.subr.mxu0 0.0
    %385 = vmatpush1.msra.mxu0 0.0
    %386 = vmatprep.mubr.f32.mxu0 0.0
    %387 = vmatmul.mubr.f32.gmra.mrb[0].mxu0 %v41
    %v388 = vpop.f32.mrb[0].mxu0
    %v389 = vadd.f32 0.0, %v388
    %v390 = vpop.f32.mrb[0].mxu0
    %v391 = vadd.f32 0.0, %v390
    %392 = vmatprep.mubr.f32.mxu0 0.0
    %393 = vmatmul.mubr.f32.gmra.mrb[0].mxu0 %v44
    %v394 = vpop.f32.mrb[0].mxu0
    %v395 = vadd.f32 0.0, %v394
    %v396 = vpop.f32.mrb[0].mxu0
    %v397 = vadd.f32 0.0, %v396
    %398 = vmatprep.mubr.f32.mxu0 0.0
    %399 = vmatmul.mubr.f32.gmra.mrb[0].mxu0 %v47
    %v400 = vpop.f32.mrb[0].mxu0
    %v401 = vadd.f32 0.0, %v400
    %v402 = vpop.f32.mrb[0].mxu0
    %v403 = vadd.f32 0.0, %v402
    %404 = vmatprep.mubr.f32.mxu0 0.0
    %405 = vmatmul.mubr.f32.gmra.mrb[0].mxu0 %v50
    %v406 = vpop.f32.mrb[0].mxu0
    %v407 = vadd.f32 0.0, %v406
    %v408 = vpop.f32.mrb[0].mxu0
    %v409 = vadd.f32 0.0, %v408
    %410 = vmatprep.mubr.f32.mxu0 0.0
    %411 = vmatmul.mubr.f32.gmra.mrb[0].mxu0 %v53
    %v412 = vpop.f32.mrb[0].mxu0
    %v413 = vadd.f32 0.0, %v412
    %v414 = vpop.f32.mrb[0].mxu0
    %v415 = vadd.f32 0.0, %v414
    %416 = vmatprep.mubr.f32.mxu0 0.0
    %417 = vmatmul.mubr.f32.gmra.mrb[0].mxu0 %v56
    %v418 = vpop.f32.mrb[0].mxu0
    %v419 = vadd.f32 0.0, %v418
    %v420 = vpop.f32.mrb[0].mxu0
    %v421 = vadd.f32 0.0, %v420
    %422 = vmatprep.mubr.f32.mxu0 0.0
    %423 = vmatmul.mubr.f32.gmra.mrb[0].mxu0 %v59
    %v424 = vpop.f32.mrb[0].mxu0
    %v425 = vadd.f32 0.0, %v424
    %v426 = vpop.f32.mrb[0].mxu0
    %v427 = vadd.f32 0.0, %v426
    %428 = vmatprep.mubr.f32.mxu0 0.0
    %429 = vmatmul.mubr.f32.gmra.mrb[0].mxu0 %v62
    %v430 = vpop.f32.mrb[0].mxu0
    %v431 = vadd.f32 0.0, %v430
    %v432 = vpop.f32.mrb[0].mxu0
    %v433 = vadd.f32 0.0, %v432
    %434 = vmatprep.mubr.f32.mxu0 0.0
    %435 = vmatmul.mubr.f32.gmra.mrb[0].mxu0 %v65
    %v436 = vpop.f32.mrb[0].mxu0
    %v437 = vadd.f32 0.0, %v436
    %v438 = vpop.f32.mrb[0].mxu0
    %v439 = vadd.f32 0.0, %v438
    %440 = vdwg.mxu0
    %441 = vmatprep.subr.mxu0 %v82
    %442 = vmatpush1.msra.mxu0 %v80
    %443 = vmatprep.subr.mxu0 0.0
    %444 = vmatpush1.msra.mxu0 0.0
    %445 = vmatprep.subr.mxu0 0.0
    %446 = vmatpush1.msra.mxu0 0.0
    %447 = vmatprep.subr.mxu0 0.0
    %448 = vmatpush1.msra.mxu0 0.0
    %449 = vmatprep.subr.mxu0 0.0
    %450 = vmatpush1.msra.mxu0 0.0
    %451 = vmatprep.subr.mxu0 0.0
    %452 = vmatpush1.msra.mxu0 0.0
    %453 = vmatprep.subr.mxu0 0.0
    %454 = vmatpush1.msra.mxu0 0.0
    %455 = vmatprep.subr.mxu0 0.0
    %456 = vmatpush1.msra.mxu0 0.0
    %457 = vmatprep.subr.mxu0 0.0
    %458 = vmatpush1.msra.mxu0 0.0
    %459 = vmatprep.subr.mxu0 0.0
    %460 = vmatpush1.msra.mxu0 0.0
    %461 = vmatprep.subr.mxu0 0.0
    %462 = vmatpush1.msra.mxu0 0.0
    %463 = vmatprep.subr.mxu0 0.0
    %464 = vmatpush1.msra.mxu0 0.0
    %465 = vmatprep.subr.mxu0 0.0
    %466 = vmatpush1.msra.mxu0 0.0
    %467 = vmatprep.subr.mxu0 0.0
    %468 = vmatpush1.msra.mxu0 0.0
    %469 = vmatprep.subr.mxu0 0.0
    %470 = vmatpush1.msra.mxu0 0.0
    %471 = vmatprep.subr.mxu0 0.0
    %472 = vmatpush1.msra.mxu0 0.0
    %473 = vmatprep.subr.mxu0 0.0
    %474 = vmatpush1.msra.mxu0 0.0
    %475 = vmatprep.subr.mxu0 0.0
    %476 = vmatpush1.msra.mxu0 0.0
    %477 = vmatprep.subr.mxu0 0.0
    %478 = vmatpush1.msra.mxu0 0.0
    %479 = vmatprep.subr.mxu0 0.0
    %480 = vmatpush1.msra.mxu0 0.0
    %481 = vmatprep.subr.mxu0 0.0
    %482 = vmatpush1.msra.mxu0 0.0
    %483 = vmatprep.subr.mxu0 0.0
    %484 = vmatpush1.msra.mxu0 0.0
    %485 = vmatprep.subr.mxu0 0.0
    %486 = vmatpush1.msra.mxu0 0.0
    %487 = vmatprep.subr.mxu0 0.0
    %488 = vmatpush1.msra.mxu0 0.0
    %489 = vmatprep.subr.mxu0 0.0
    %490 = vmatpush1.msra.mxu0 0.0
    %491 = vmatprep.subr.mxu0 0.0
    %492 = vmatpush1.msra.mxu0 0.0
    %493 = vmatprep.subr.mxu0 0.0
    %494 = vmatpush1.msra.mxu0 0.0
    %495 = vmatprep.subr.mxu0 0.0
    %496 = vmatpush1.msra.mxu0 0.0
    %497 = vmatprep.subr.mxu0 0.0
    %498 = vmatpush1.msra.mxu0 0.0
    %499 = vmatprep.subr.mxu0 0.0
    %500 = vmatpush1.msra.mxu0 0.0
    %501 = vmatprep.subr.mxu0 0.0
    %502 = vmatpush1.msra.mxu0 0.0
    %503 = vmatprep.subr.mxu0 0.0
    %504 = vmatpush1.msra.mxu0 0.0
    %505 = vmatprep.mubr.f32.mxu0 0.0
    %506 = vmatmul.mubr.f32.gmra.mrb[0].mxu0 %v41
    %v507 = vpop.f32.mrb[0].mxu0
    %v508 = vadd.f32 0.0, %v507
    %v509 = vpop.f32.mrb[0].mxu0
    %v510 = vadd.f32 0.0, %v509
    %511 = vmatprep.mubr.f32.mxu0 0.0
    %512 = vmatmul.mubr.f32.gmra.mrb[0].mxu0 %v44
    %v513 = vpop.f32.mrb[0].mxu0
    %v514 = vadd.f32 0.0, %v513
    %v515 = vpop.f32.mrb[0].mxu0
    %v516 = vadd.f32 0.0, %v515
    %517 = vmatprep.mubr.f32.mxu0 0.0
    %518 = vmatmul.mubr.f32.gmra.mrb[0].mxu0 %v47
    %v519 = vpop.f32.mrb[0].mxu0
    %v520 = vadd.f32 0.0, %v519
    %v521 = vpop.f32.mrb[0].mxu0
    %v522 = vadd.f32 0.0, %v521
    %523 = vmatprep.mubr.f32.mxu0 0.0
    %524 = vmatmul.mubr.f32.gmra.mrb[0].mxu0 %v50
    %v525 = vpop.f32.mrb[0].mxu0
    %v526 = vadd.f32 0.0, %v525
    %v527 = vpop.f32.mrb[0].mxu0
    %v528 = vadd.f32 0.0, %v527
    %529 = vmatprep.mubr.f32.mxu0 0.0
    %530 = vmatmul.mubr.f32.gmra.mrb[0].mxu0 %v53
    %v531 = vpop.f32.mrb[0].mxu0
    %v532 = vadd.f32 0.0, %v531
    %v533 = vpop.f32.mrb[0].mxu0
    %v534 = vadd.f32 0.0, %v533
    %535 = vmatprep.mubr.f32.mxu0 0.0
    %536 = vmatmul.mubr.f32.gmra.mrb[0].mxu0 %v56
    %v537 = vpop.f32.mrb[0].mxu0
    %v538 = vadd.f32 0.0, %v537
    %v539 = vpop.f32.mrb[0].mxu0
    %v540 = vadd.f32 0.0, %v539
    %541 = vmatprep.mubr.f32.mxu0 0.0
    %542 = vmatmul.mubr.f32.gmra.mrb[0].mxu0 %v59
    %v543 = vpop.f32.mrb[0].mxu0
    %v544 = vadd.f32 0.0, %v543
    %v545 = vpop.f32.mrb[0].mxu0
    %v546 = vadd.f32 0.0, %v545
    %547 = vmatprep.mubr.f32.mxu0 0.0
    %548 = vmatmul.mubr.f32.gmra.mrb[0].mxu0 %v62
    %v549 = vpop.f32.mrb[0].mxu0
    %v550 = vadd.f32 0.0, %v549
    %v551 = vpop.f32.mrb[0].mxu0
    %v552 = vadd.f32 0.0, %v551
    %553 = vmatprep.mubr.f32.mxu0 0.0
    %554 = vmatmul.mubr.f32.gmra.mrb[0].mxu0 %v65
    %v555 = vpop.f32.mrb[0].mxu0
    %v556 = vadd.f32 0.0, %v555
    %v557 = vpop.f32.mrb[0].mxu0
    %v558 = vadd.f32 0.0, %v557
    %559 = vdwg.mxu0
    %v560 = vmax.f32 %v151, 0.0
    %v561 = vmax.f32 %v153, 0.0
    %v562 = vmax.f32 %v270, 0.0
    %v563 = vmax.f32 %v272, 0.0
    %v564 = vmax.f32 %v389, 0.0
    %v565 = vmax.f32 %v391, 0.0
    %v566 = vmax.f32 %v508, 0.0
    %v567 = vmax.f32 %v510, 0.0
    %v568 = vmax.f32 %v157, 0.0
    %v569 = vmax.f32 %v159, 0.0
    %v570 = vmax.f32 %v276, 0.0
    %v571 = vmax.f32 %v278, 0.0
    %v572 = vmax.f32 %v395, 0.0
    %v573 = vmax.f32 %v397, 0.0
    %v574 = vmax.f32 %v514, 0.0
    %v575 = vmax.f32 %v516, 0.0
    %v576 = vmax.f32 %v163, 0.0
    %v577 = vmax.f32 %v165, 0.0
    %v578 = vmax.f32 %v282, 0.0
    %v579 = vmax.f32 %v284, 0.0
    %v580 = vmax.f32 %v401, 0.0
    %v581 = vmax.f32 %v403, 0.0
    %v582 = vmax.f32 %v520, 0.0
    %v583 = vmax.f32 %v522, 0.0
    %v584 = vmax.f32 %v169, 0.0
    %v585 = vmax.f32 %v171, 0.0
    %v586 = vmax.f32 %v288, 0.0
    %v587 = vmax.f32 %v290, 0.0
    %v588 = vmax.f32 %v407, 0.0
    %v589 = vmax.f32 %v409, 0.0
    %v590 = vmax.f32 %v526, 0.0
    %v591 = vmax.f32 %v528, 0.0
    %v592 = vmax.f32 %v175, 0.0
    %v593 = vmax.f32 %v177, 0.0
    %v594 = vmax.f32 %v294, 0.0
    %v595 = vmax.f32 %v296, 0.0
    %v596 = vmax.f32 %v413, 0.0
    %v597 = vmax.f32 %v415, 0.0
    %v598 = vmax.f32 %v532, 0.0
    %v599 = vmax.f32 %v534, 0.0
    %v600 = vmax.f32 %v181, 0.0
    %v601 = vmax.f32 %v183, 0.0
    %v602 = vmax.f32 %v300, 0.0
    %v603 = vmax.f32 %v302, 0.0
    %v604 = vmax.f32 %v419, 0.0
    %v605 = vmax.f32 %v421, 0.0
    %v606 = vmax.f32 %v538, 0.0
    %v607 = vmax.f32 %v540, 0.0
    %v608 = vmax.f32 %v187, 0.0
    %v609 = vmax.f32 %v189, 0.0
    %v610 = vmax.f32 %v306, 0.0
    %v611 = vmax.f32 %v308, 0.0
    %v612 = vmax.f32 %v425, 0.0
    %v613 = vmax.f32 %v427, 0.0
    %v614 = vmax.f32 %v544, 0.0
    %v615 = vmax.f32 %v546, 0.0
    %v616 = vmax.f32 %v193, 0.0
    %v617 = vmax.f32 %v195, 0.0
    %v618 = vmax.f32 %v312, 0.0
    %v619 = vmax.f32 %v314, 0.0
    %v620 = vmax.f32 %v431, 0.0
    %v621 = vmax.f32 %v433, 0.0
    %v622 = vmax.f32 %v550, 0.0
    %v623 = vmax.f32 %v552, 0.0
    %v624 = vmax.f32 %v199, 0.0
    %v625 = vmax.f32 %v201, 0.0
    %v626 = vmax.f32 %v318, 0.0
    %v627 = vmax.f32 %v320, 0.0
    %v628 = vmax.f32 %v437, 0.0
    %v629 = vmax.f32 %v439, 0.0
    %v630 = vmax.f32 %v556, 0.0
    %v631 = vmax.f32 %v558, 0.0
    %v632 = vld [vmem:[%s2] sm:$0xff]
    %v633 = vld [vmem:[%s2 + $0x8] sm:$0xff]
    %v634 = vld [vmem:[%s2 + $0x10] sm:$0xff]
    %v635 = vld [vmem:[%s2 + $0x18] sm:$0xff]
    %v636 = vld [vmem:[%s2 + $0x20] sm:$0x1]
    %vm637 = vcmask 531456
    %v639 = vsel %vm637, %v632, 0
    %v642 = vsel %vm637, %v633, 0
    %v645 = vsel %vm637, %v634, 0
    %v648 = vsel %vm637, %v635, 0
    %v651 = vsel %vm637, %v636, 0
    %vm653 = vcmask 1040384
    %v655 = vsel %vm653, %v624, 0
    %v658 = vsel %vm653, %v625, 0
    %v661 = vsel %vm653, %v626, 0
    %v664 = vsel %vm653, %v627, 0
    %v667 = vsel %vm653, %v628, 0
    %v670 = vsel %vm653, %v629, 0
    %v673 = vsel %vm653, %v630, 0
    %v676 = vsel %vm653, %v631, 0
    %678 = vmatprep.subr.mxu0 %v561
    %679 = vmatpush1.msra.mxu0 %v560
    %680 = vmatprep.subr.mxu0 %v569
    %681 = vmatpush1.msra.mxu0 %v568
    %682 = vmatprep.subr.mxu0 %v577
    %683 = vmatpush1.msra.mxu0 %v576
    %684 = vmatprep.subr.mxu0 %v585
    %685 = vmatpush1.msra.mxu0 %v584
    %686 = vmatprep.subr.mxu0 %v593
    %687 = vmatpush1.msra.mxu0 %v592
    %688 = vmatprep.subr.mxu0 %v601
    %689 = vmatpush1.msra.mxu0 %v600
    %690 = vmatprep.subr.mxu0 %v609
    %691 = vmatpush1.msra.mxu0 %v608
    %692 = vmatprep.subr.mxu0 %v617
    %693 = vmatpush1.msra.mxu0 %v616
    %694 = vmatprep.subr.mxu0 %v658
    %695 = vmatpush1.msra.mxu0 %v655
    %696 = vmatprep.subr.mxu0 0.0
    %697 = vmatpush1.msra.mxu0 0.0
    %698 = vmatprep.subr.mxu0 0.0
    %699 = vmatpush1.msra.mxu0 0.0
    %700 = vmatprep.subr.mxu0 0.0
    %701 = vmatpush1.msra.mxu0 0.0
    %702 = vmatprep.subr.mxu0 0.0
    %703 = vmatpush1.msra.mxu0 0.0
    %704 = vmatprep.subr.mxu0 0.0
    %705 = vmatpush1.msra.mxu0 0.0
    %706 = vmatprep.subr.mxu0 0.0
    %707 = vmatpush1.msra.mxu0 0.0
    %708 = vmatprep.subr.mxu0 0.0
    %709 = vmatpush1.msra.mxu0 0.0
    %710 = vmatprep.subr.mxu0 0.0
    %711 = vmatpush1.msra.mxu0 0.0
    %712 = vmatprep.subr.mxu0 0.0
    %713 = vmatpush1.msra.mxu0 0.0
    %714 = vmatprep.subr.mxu0 0.0
    %715 = vmatpush1.msra.mxu0 0.0
    %716 = vmatprep.subr.mxu0 0.0
    %717 = vmatpush1.msra.mxu0 0.0
    %718 = vmatprep.subr.mxu0 0.0
    %719 = vmatpush1.msra.mxu0 0.0
    %720 = vmatprep.subr.mxu0 0.0
    %721 = vmatpush1.msra.mxu0 0.0
    %722 = vmatprep.subr.mxu0 0.0
    %723 = vmatpush1.msra.mxu0 0.0
    %724 = vmatprep.subr.mxu0 0.0
    %725 = vmatpush1.msra.mxu0 0.0
    %726 = vmatprep.subr.mxu0 0.0
    %727 = vmatpush1.msra.mxu0 0.0
    %728 = vmatprep.subr.mxu0 0.0
    %729 = vmatpush1.msra.mxu0 0.0
    %730 = vmatprep.subr.mxu0 0.0
    %731 = vmatpush1.msra.mxu0 0.0
    %732 = vmatprep.subr.mxu0 0.0
    %733 = vmatpush1.msra.mxu0 0.0
    %734 = vmatprep.subr.mxu0 0.0
    %735 = vmatpush1.msra.mxu0 0.0
    %736 = vmatprep.subr.mxu0 0.0
    %737 = vmatpush1.msra.mxu0 0.0
    %738 = vmatprep.subr.mxu0 0.0
    %739 = vmatpush1.msra.mxu0 0.0
    %740 = vmatprep.subr.mxu0 0.0
    %741 = vmatpush1.msra.mxu0 0.0
    %742 = vmatprep.mubr.f32.mxu0 0.0
    %743 = vmatmul.mubr.f32.gmra.mrb[0].mxu0 %v639
    %v744 = vpop.f32.mrb[0].mxu0
    %v745 = vadd.f32 0.0, %v744
    %v746 = vpop.f32.mrb[0].mxu0
    %v747 = vadd.f32 0.0, %v746
    %748 = vmatprep.mubr.f32.mxu0 0.0
    %749 = vmatmul.mubr.f32.gmra.mrb[0].mxu0 %v642
    %v750 = vpop.f32.mrb[0].mxu0
    %v751 = vadd.f32 0.0, %v750
    %v752 = vpop.f32.mrb[0].mxu0
    %v753 = vadd.f32 0.0, %v752
    %754 = vmatprep.mubr.f32.mxu0 0.0
    %755 = vmatmul.mubr.f32.gmra.mrb[0].mxu0 %v645
    %v756 = vpop.f32.mrb[0].mxu0
    %v757 = vadd.f32 0.0, %v756
    %v758 = vpop.f32.mrb[0].mxu0
    %v759 = vadd.f32 0.0, %v758
    %760 = vmatprep.mubr.f32.mxu0 0.0
    %761 = vmatmul.mubr.f32.gmra.mrb[0].mxu0 %v648
    %v762 = vpop.f32.mrb[0].mxu0
    %v763 = vadd.f32 0.0, %v762
    %v764 = vpop.f32.mrb[0].mxu0
    %v765 = vadd.f32 0.0, %v764
    %766 = vmatprep.mubr.f32.mxu0 0.0
    %767 = vmatmul.mubr.f32.gmra.mrb[0].mxu0 %v651
    %v768 = vpop.f32.mrb[0].mxu0
    %v769 = vadd.f32 0.0, %v768
    %v770 = vpop.f32.mrb[0].mxu0
    %v771 = vadd.f32 0.0, %v770
    %772 = vdwg.mxu0
    %773 = vmatprep.subr.mxu0 %v563
    %774 = vmatpush1.msra.mxu0 %v562
    %775 = vmatprep.subr.mxu0 %v571
    %776 = vmatpush1.msra.mxu0 %v570
    %777 = vmatprep.subr.mxu0 %v579
    %778 = vmatpush1.msra.mxu0 %v578
    %779 = vmatprep.subr.mxu0 %v587
    %780 = vmatpush1.msra.mxu0 %v586
    %781 = vmatprep.subr.mxu0 %v595
    %782 = vmatpush1.msra.mxu0 %v594
    %783 = vmatprep.subr.mxu0 %v603
    %784 = vmatpush1.msra.mxu0 %v602
    %785 = vmatprep.subr.mxu0 %v611
    %786 = vmatpush1.msra.mxu0 %v610
    %787 = vmatprep.subr.mxu0 %v619
    %788 = vmatpush1.msra.mxu0 %v618
    %789 = vmatprep.subr.mxu0 %v664
    %790 = vmatpush1.msra.mxu0 %v661
    %791 = vmatprep.subr.mxu0 0.0
    %792 = vmatpush1.msra.mxu0 0.0
    %793 = vmatprep.subr.mxu0 0.0
    %794 = vmatpush1.msra.mxu0 0.0
    %795 = vmatprep.subr.mxu0 0.0
    %796 = vmatpush1.msra.mxu0 0.0
    %797 = vmatprep.subr.mxu0 0.0
    %798 = vmatpush1.msra.mxu0 0.0
    %799 = vmatprep.subr.mxu0 0.0
    %800 = vmatpush1.msra.mxu0 0.0
    %801 = vmatprep.subr.mxu0 0.0
    %802 = vmatpush1.msra.mxu0 0.0
    %803 = vmatprep.subr.mxu0 0.0
    %804 = vmatpush1.msra.mxu0 0.0
    %805 = vmatprep.subr.mxu0 0.0
    %806 = vmatpush1.msra.mxu0 0.0
    %807 = vmatprep.subr.mxu0 0.0
    %808 = vmatpush1.msra.mxu0 0.0
    %809 = vmatprep.subr.mxu0 0.0
    %810 = vmatpush1.msra.mxu0 0.0
    %811 = vmatprep.subr.mxu0 0.0
    %812 = vmatpush1.msra.mxu0 0.0
    %813 = vmatprep.subr.mxu0 0.0
    %814 = vmatpush1.msra.mxu0 0.0
    %815 = vmatprep.subr.mxu0 0.0
    %816 = vmatpush1.msra.mxu0 0.0
    %817 = vmatprep.subr.mxu0 0.0
    %818 = vmatpush1.msra.mxu0 0.0
    %819 = vmatprep.subr.mxu0 0.0
    %820 = vmatpush1.msra.mxu0 0.0
    %821 = vmatprep.subr.mxu0 0.0
    %822 = vmatpush1.msra.mxu0 0.0
    %823 = vmatprep.subr.mxu0 0.0
    %824 = vmatpush1.msra.mxu0 0.0
    %825 = vmatprep.subr.mxu0 0.0
    %826 = vmatpush1.msra.mxu0 0.0
    %827 = vmatprep.subr.mxu0 0.0
    %828 = vmatpush1.msra.mxu0 0.0
    %829 = vmatprep.subr.mxu0 0.0
    %830 = vmatpush1.msra.mxu0 0.0
    %831 = vmatprep.subr.mxu0 0.0
    %832 = vmatpush1.msra.mxu0 0.0
    %833 = vmatprep.subr.mxu0 0.0
    %834 = vmatpush1.msra.mxu0 0.0
    %835 = vmatprep.subr.mxu0 0.0
    %836 = vmatpush1.msra.mxu0 0.0
    %837 = vmatprep.mubr.f32.mxu0 0.0
    %838 = vmatmul.mubr.f32.gmra.mrb[0].mxu0 %v639
    %v839 = vpop.f32.mrb[0].mxu0
    %v840 = vadd.f32 0.0, %v839
    %v841 = vpop.f32.mrb[0].mxu0
    %v842 = vadd.f32 0.0, %v841
    %843 = vmatprep.mubr.f32.mxu0 0.0
    %844 = vmatmul.mubr.f32.gmra.mrb[0].mxu0 %v642
    %v845 = vpop.f32.mrb[0].mxu0
    %v846 = vadd.f32 0.0, %v845
    %v847 = vpop.f32.mrb[0].mxu0
    %v848 = vadd.f32 0.0, %v847
    %849 = vmatprep.mubr.f32.mxu0 0.0
    %850 = vmatmul.mubr.f32.gmra.mrb[0].mxu0 %v645
    %v851 = vpop.f32.mrb[0].mxu0
    %v852 = vadd.f32 0.0, %v851
    %v853 = vpop.f32.mrb[0].mxu0
    %v854 = vadd.f32 0.0, %v853
    %855 = vmatprep.mubr.f32.mxu0 0.0
    %856 = vmatmul.mubr.f32.gmra.mrb[0].mxu0 %v648
    %v857 = vpop.f32.mrb[0].mxu0
    %v858 = vadd.f32 0.0, %v857
    %v859 = vpop.f32.mrb[0].mxu0
    %v860 = vadd.f32 0.0, %v859
    %861 = vmatprep.mubr.f32.mxu0 0.0
    %862 = vmatmul.mubr.f32.gmra.mrb[0].mxu0 %v651
    %v863 = vpop.f32.mrb[0].mxu0
    %v864 = vadd.f32 0.0, %v863
    %v865 = vpop.f32.mrb[0].mxu0
    %v866 = vadd.f32 0.0, %v865
    %867 = vdwg.mxu0
    %868 = vmatprep.subr.mxu0 %v565
    %869 = vmatpush1.msra.mxu0 %v564
    %870 = vmatprep.subr.mxu0 %v573
    %871 = vmatpush1.msra.mxu0 %v572
    %872 = vmatprep.subr.mxu0 %v581
    %873 = vmatpush1.msra.mxu0 %v580
    %874 = vmatprep.subr.mxu0 %v589
    %875 = vmatpush1.msra.mxu0 %v588
    %876 = vmatprep.subr.mxu0 %v597
    %877 = vmatpush1.msra.mxu0 %v596
    %878 = vmatprep.subr.mxu0 %v605
    %879 = vmatpush1.msra.mxu0 %v604
    %880 = vmatprep.subr.mxu0 %v613
    %881 = vmatpush1.msra.mxu0 %v612
    %882 = vmatprep.subr.mxu0 %v621
    %883 = vmatpush1.msra.mxu0 %v620
    %884 = vmatprep.subr.mxu0 %v670
    %885 = vmatpush1.msra.mxu0 %v667
    %886 = vmatprep.subr.mxu0 0.0
    %887 = vmatpush1.msra.mxu0 0.0
    %888 = vmatprep.subr.mxu0 0.0
    %889 = vmatpush1.msra.mxu0 0.0
    %890 = vmatprep.subr.mxu0 0.0
    %891 = vmatpush1.msra.mxu0 0.0
    %892 = vmatprep.subr.mxu0 0.0
    %893 = vmatpush1.msra.mxu0 0.0
    %894 = vmatprep.subr.mxu0 0.0
    %895 = vmatpush1.msra.mxu0 0.0
    %896 = vmatprep.subr.mxu0 0.0
    %897 = vmatpush1.msra.mxu0 0.0
    %898 = vmatprep.subr.mxu0 0.0
    %899 = vmatpush1.msra.mxu0 0.0
    %900 = vmatprep.subr.mxu0 0.0
    %901 = vmatpush1.msra.mxu0 0.0
    %902 = vmatprep.subr.mxu0 0.0
    %903 = vmatpush1.msra.mxu0 0.0
    %904 = vmatprep.subr.mxu0 0.0
    %905 = vmatpush1.msra.mxu0 0.0
    %906 = vmatprep.subr.mxu0 0.0
    %907 = vmatpush1.msra.mxu0 0.0
    %908 = vmatprep.subr.mxu0 0.0
    %909 = vmatpush1.msra.mxu0 0.0
    %910 = vmatprep.subr.mxu0 0.0
    %911 = vmatpush1.msra.mxu0 0.0
    %912 = vmatprep.subr.mxu0 0.0
    %913 = vmatpush1.msra.mxu0 0.0
    %914 = vmatprep.subr.mxu0 0.0
    %915 = vmatpush1.msra.mxu0 0.0
    %916 = vmatprep.subr.mxu0 0.0
    %917 = vmatpush1.msra.mxu0 0.0
    %918 = vmatprep.subr.mxu0 0.0
    %919 = vmatpush1.msra.mxu0 0.0
    %920 = vmatprep.subr.mxu0 0.0
    %921 = vmatpush1.msra.mxu0 0.0
    %922 = vmatprep.subr.mxu0 0.0
    %923 = vmatpush1.msra.mxu0 0.0
    %924 = vmatprep.subr.mxu0 0.0
    %925 = vmatpush1.msra.mxu0 0.0
    %926 = vmatprep.subr.mxu0 0.0
    %927 = vmatpush1.msra.mxu0 0.0
    %928 = vmatprep.subr.mxu0 0.0
    %929 = vmatpush1.msra.mxu0 0.0
    %930 = vmatprep.subr.mxu0 0.0
    %931 = vmatpush1.msra.mxu0 0.0
    %932 = vmatprep.mubr.f32.mxu0 0.0
    %933 = vmatmul.mubr.f32.gmra.mrb[0].mxu0 %v639
    %v934 = vpop.f32.mrb[0].mxu0
    %v935 = vadd.f32 0.0, %v934
    %v936 = vpop.f32.mrb[0].mxu0
    %v937 = vadd.f32 0.0, %v936
    %938 = vmatprep.mubr.f32.mxu0 0.0
    %939 = vmatmul.mubr.f32.gmra.mrb[0].mxu0 %v642
    %v940 = vpop.f32.mrb[0].mxu0
    %v941 = vadd.f32 0.0, %v940
    %v942 = vpop.f32.mrb[0].mxu0
    %v943 = vadd.f32 0.0, %v942
    %944 = vmatprep.mubr.f32.mxu0 0.0
    %945 = vmatmul.mubr.f32.gmra.mrb[0].mxu0 %v645
    %v946 = vpop.f32.mrb[0].mxu0
    %v947 = vadd.f32 0.0, %v946
    %v948 = vpop.f32.mrb[0].mxu0
    %v949 = vadd.f32 0.0, %v948
    %950 = vmatprep.mubr.f32.mxu0 0.0
    %951 = vmatmul.mubr.f32.gmra.mrb[0].mxu0 %v648
    %v952 = vpop.f32.mrb[0].mxu0
    %v953 = vadd.f32 0.0, %v952
    %v954 = vpop.f32.mrb[0].mxu0
    %v955 = vadd.f32 0.0, %v954
    %956 = vmatprep.mubr.f32.mxu0 0.0
    %957 = vmatmul.mubr.f32.gmra.mrb[0].mxu0 %v651
    %v958 = vpop.f32.mrb[0].mxu0
    %v959 = vadd.f32 0.0, %v958
    %v960 = vpop.f32.mrb[0].mxu0
    %v961 = vadd.f32 0.0, %v960
    %962 = vdwg.mxu0
    %963 = vmatprep.subr.mxu0 %v567
    %964 = vmatpush1.msra.mxu0 %v566
    %965 = vmatprep.subr.mxu0 %v575
    %966 = vmatpush1.msra.mxu0 %v574
    %967 = vmatprep.subr.mxu0 %v583
    %968 = vmatpush1.msra.mxu0 %v582
    %969 = vmatprep.subr.mxu0 %v591
    %970 = vmatpush1.msra.mxu0 %v590
    %971 = vmatprep.subr.mxu0 %v599
    %972 = vmatpush1.msra.mxu0 %v598
    %973 = vmatprep.subr.mxu0 %v607
    %974 = vmatpush1.msra.mxu0 %v606
    %975 = vmatprep.subr.mxu0 %v615
    %976 = vmatpush1.msra.mxu0 %v614
    %977 = vmatprep.subr.mxu0 %v623
    %978 = vmatpush1.msra.mxu0 %v622
    %979 = vmatprep.subr.mxu0 %v676
    %980 = vmatpush1.msra.mxu0 %v673
    %981 = vmatprep.subr.mxu0 0.0
    %982 = vmatpush1.msra.mxu0 0.0
    %983 = vmatprep.subr.mxu0 0.0
    %984 = vmatpush1.msra.mxu0 0.0
    %985 = vmatprep.subr.mxu0 0.0
    %986 = vmatpush1.msra.mxu0 0.0
    %987 = vmatprep.subr.mxu0 0.0
    %988 = vmatpush1.msra.mxu0 0.0
    %989 = vmatprep.subr.mxu0 0.0
    %990 = vmatpush1.msra.mxu0 0.0
    %991 = vmatprep.subr.mxu0 0.0
    %992 = vmatpush1.msra.mxu0 0.0
    %993 = vmatprep.subr.mxu0 0.0
    %994 = vmatpush1.msra.mxu0 0.0
    %995 = vmatprep.subr.mxu0 0.0
    %996 = vmatpush1.msra.mxu0 0.0
    %997 = vmatprep.subr.mxu0 0.0
    %998 = vmatpush1.msra.mxu0 0.0
    %999 = vmatprep.subr.mxu0 0.0
    %1000 = vmatpush1.msra.mxu0 0.0
    %1001 = vmatprep.subr.mxu0 0.0
    %1002 = vmatpush1.msra.mxu0 0.0
    %1003 = vmatprep.subr.mxu0 0.0
    %1004 = vmatpush1.msra.mxu0 0.0
    %1005 = vmatprep.subr.mxu0 0.0
    %1006 = vmatpush1.msra.mxu0 0.0
    %1007 = vmatprep.subr.mxu0 0.0
    %1008 = vmatpush1.msra.mxu0 0.0
    %1009 = vmatprep.subr.mxu0 0.0
    %1010 = vmatpush1.msra.mxu0 0.0
    %1011 = vmatprep.subr.mxu0 0.0
    %1012 = vmatpush1.msra.mxu0 0.0
    %1013 = vmatprep.subr.mxu0 0.0
    %1014 = vmatpush1.msra.mxu0 0.0
    %1015 = vmatprep.subr.mxu0 0.0
    %1016 = vmatpush1.msra.mxu0 0.0
    %1017 = vmatprep.subr.mxu0 0.0
    %1018 = vmatpush1.msra.mxu0 0.0
    %1019 = vmatprep.subr.mxu0 0.0
    %1020 = vmatpush1.msra.mxu0 0.0
    %1021 = vmatprep.subr.mxu0 0.0
    %1022 = vmatpush1.msra.mxu0 0.0
    %1023 = vmatprep.subr.mxu0 0.0
    %1024 = vmatpush1.msra.mxu0 0.0
    %1025 = vmatprep.subr.mxu0 0.0
    %1026 = vmatpush1.msra.mxu0 0.0
    %1027 = vmatprep.mubr.f32.mxu0 0.0
    %1028 = vmatmul.mubr.f32.gmra.mrb[0].mxu0 %v639
    %v1029 = vpop.f32.mrb[0].mxu0
    %v1030 = vadd.f32 0.0, %v1029
    %v1031 = vpop.f32.mrb[0].mxu0
    %v1032 = vadd.f32 0.0, %v1031
    %1033 = vmatprep.mubr.f32.mxu0 0.0
    %1034 = vmatmul.mubr.f32.gmra.mrb[0].mxu0 %v642
    %v1035 = vpop.f32.mrb[0].mxu0
    %v1036 = vadd.f32 0.0, %v1035
    %v1037 = vpop.f32.mrb[0].mxu0
    %v1038 = vadd.f32 0.0, %v1037
    %1039 = vmatprep.mubr.f32.mxu0 0.0
    %1040 = vmatmul.mubr.f32.gmra.mrb[0].mxu0 %v645
    %v1041 = vpop.f32.mrb[0].mxu0
    %v1042 = vadd.f32 0.0, %v1041
    %v1043 = vpop.f32.mrb[0].mxu0
    %v1044 = vadd.f32 0.0, %v1043
    %1045 = vmatprep.mubr.f32.mxu0 0.0
    %1046 = vmatmul.mubr.f32.gmra.mrb[0].mxu0 %v648
    %v1047 = vpop.f32.mrb[0].mxu0
    %v1048 = vadd.f32 0.0, %v1047
    %v1049 = vpop.f32.mrb[0].mxu0
    %v1050 = vadd.f32 0.0, %v1049
    %1051 = vmatprep.mubr.f32.mxu0 0.0
    %1052 = vmatmul.mubr.f32.gmra.mrb[0].mxu0 %v651
    %v1053 = vpop.f32.mrb[0].mxu0
    %v1054 = vadd.f32 0.0, %v1053
    %v1055 = vpop.f32.mrb[0].mxu0
    %v1056 = vadd.f32 0.0, %v1055
    %1057 = vdwg.mxu0
    %v1058 = vmax.f32 %v745, 0.0
    %v1059 = vmax.f32 %v747, 0.0
    %v1060 = vmax.f32 %v840, 0.0
    %v1061 = vmax.f32 %v842, 0.0
    %v1062 = vmax.f32 %v935, 0.0
    %v1063 = vmax.f32 %v937, 0.0
    %v1064 = vmax.f32 %v1030, 0.0
    %v1065 = vmax.f32 %v1032, 0.0
    %v1066 = vmax.f32 %v751, 0.0
    %v1067 = vmax.f32 %v753, 0.0
    %v1068 = vmax.f32 %v846, 0.0
    %v1069 = vmax.f32 %v848, 0.0
    %v1070 = vmax.f32 %v941, 0.0
    %v1071 = vmax.f32 %v943, 0.0
    %v1072 = vmax.f32 %v1036, 0.0
    %v1073 = vmax.f32 %v1038, 0.0
    %v1074 = vmax.f32 %v757, 0.0
    %v1075 = vmax.f32 %v759, 0.0
    %v1076 = vmax.f32 %v852, 0.0
    %v1077 = vmax.f32 %v854, 0.0
    %v1078 = vmax.f32 %v947, 0.0
    %v1079 = vmax.f32 %v949, 0.0
    %v1080 = vmax.f32 %v1042, 0.0
    %v1081 = vmax.f32 %v1044, 0.0
    %v1082 = vmax.f32 %v763, 0.0
    %v1083 = vmax.f32 %v765, 0.0
    %v1084 = vmax.f32 %v858, 0.0
    %v1085 = vmax.f32 %v860, 0.0
    %v1086 = vmax.f32 %v953, 0.0
    %v1087 = vmax.f32 %v955, 0.0
    %v1088 = vmax.f32 %v1048, 0.0
    %v1089 = vmax.f32 %v1050, 0.0
    %v1090 = vmax.f32 %v769, 0.0
    %v1091 = vmax.f32 %v771, 0.0
    %v1092 = vmax.f32 %v864, 0.0
    %v1093 = vmax.f32 %v866, 0.0
    %v1094 = vmax.f32 %v959, 0.0
    %v1095 = vmax.f32 %v961, 0.0
    %v1096 = vmax.f32 %v1054, 0.0
    %v1097 = vmax.f32 %v1056, 0.0
    %v1098 = vld [vmem:[%s3] sm:$0x1]
    %vm1099 = vcmask 269312
    %v1101 = vsel %vm1099, %v1098, 0
    %v1104 = vsel %vm653, %v1090, 0
    %v1107 = vsel %vm653, %v1091, 0
    %v1110 = vsel %vm653, %v1092, 0
    %v1113 = vsel %vm653, %v1093, 0
    %v1116 = vsel %vm653, %v1094, 0
    %v1119 = vsel %vm653, %v1095, 0
    %v1122 = vsel %vm653, %v1096, 0
    %v1125 = vsel %vm653, %v1097, 0
    %1127 = vmatprep.subr.mxu0 %v1059
    %1128 = vmatpush1.msra.mxu0 %v1058
    %1129 = vmatprep.subr.mxu0 %v1067
    %1130 = vmatpush1.msra.mxu0 %v1066
    %1131 = vmatprep.subr.mxu0 %v1075
    %1132 = vmatpush1.msra.mxu0 %v1074
    %1133 = vmatprep.subr.mxu0 %v1083
    %1134 = vmatpush1.msra.mxu0 %v1082
    %1135 = vmatprep.subr.mxu0 %v1107
    %1136 = vmatpush1.msra.mxu0 %v1104
    %1137 = vmatprep.subr.mxu0 0.0
    %1138 = vmatpush1.msra.mxu0 0.0
    %1139 = vmatprep.subr.mxu0 0.0
    %1140 = vmatpush1.msra.mxu0 0.0
    %1141 = vmatprep.subr.mxu0 0.0
    %1142 = vmatpush1.msra.mxu0 0.0
    %1143 = vmatprep.subr.mxu0 0.0
    %1144 = vmatpush1.msra.mxu0 0.0
    %1145 = vmatprep.subr.mxu0 0.0
    %1146 = vmatpush1.msra.mxu0 0.0
    %1147 = vmatprep.subr.mxu0 0.0
    %1148 = vmatpush1.msra.mxu0 0.0
    %1149 = vmatprep.subr.mxu0 0.0
    %1150 = vmatpush1.msra.mxu0 0.0
    %1151 = vmatprep.subr.mxu0 0.0
    %1152 = vmatpush1.msra.mxu0 0.0
    %1153 = vmatprep.subr.mxu0 0.0
    %1154 = vmatpush1.msra.mxu0 0.0
    %1155 = vmatprep.subr.mxu0 0.0
    %1156 = vmatpush1.msra.mxu0 0.0
    %1157 = vmatprep.subr.mxu0 0.0
    %1158 = vmatpush1.msra.mxu0 0.0
    %1159 = vmatprep.subr.mxu0 0.0
    %1160 = vmatpush1.msra.mxu0 0.0
    %1161 = vmatprep.subr.mxu0 0.0
    %1162 = vmatpush1.msra.mxu0 0.0
    %1163 = vmatprep.subr.mxu0 0.0
    %1164 = vmatpush1.msra.mxu0 0.0
    %1165 = vmatprep.subr.mxu0 0.0
    %1166 = vmatpush1.msra.mxu0 0.0
    %1167 = vmatprep.subr.mxu0 0.0
    %1168 = vmatpush1.msra.mxu0 0.0
    %1169 = vmatprep.subr.mxu0 0.0
    %1170 = vmatpush1.msra.mxu0 0.0
    %1171 = vmatprep.subr.mxu0 0.0
    %1172 = vmatpush1.msra.mxu0 0.0
    %1173 = vmatprep.subr.mxu0 0.0
    %1174 = vmatpush1.msra.mxu0 0.0
    %1175 = vmatprep.subr.mxu0 0.0
    %1176 = vmatpush1.msra.mxu0 0.0
    %1177 = vmatprep.subr.mxu0 0.0
    %1178 = vmatpush1.msra.mxu0 0.0
    %1179 = vmatprep.subr.mxu0 0.0
    %1180 = vmatpush1.msra.mxu0 0.0
    %1181 = vmatprep.subr.mxu0 0.0
    %1182 = vmatpush1.msra.mxu0 0.0
    %1183 = vmatprep.subr.mxu0 0.0
    %1184 = vmatpush1.msra.mxu0 0.0
    %1185 = vmatprep.subr.mxu0 0.0
    %1186 = vmatpush1.msra.mxu0 0.0
    %1187 = vmatprep.subr.mxu0 0.0
    %1188 = vmatpush1.msra.mxu0 0.0
    %1189 = vmatprep.subr.mxu0 0.0
    %1190 = vmatpush1.msra.mxu0 0.0
    %1191 = vmatprep.mubr.f32.mxu0 0.0
    %1192 = vmatmul.mubr.f32.gmra.mrb[0].mxu0 %v1101
    %v1193 = vpop.f32.mrb[0].mxu0
    %v1194 = vadd.f32 0.0, %v1193
    %v1195 = vpop.f32.mrb[0].mxu0
    %v1196 = vadd.f32 0.0, %v1195
    %1197 = vdwg.mxu0
    %1198 = vmatprep.subr.mxu0 %v1061
    %1199 = vmatpush1.msra.mxu0 %v1060
    %1200 = vmatprep.subr.mxu0 %v1069
    %1201 = vmatpush1.msra.mxu0 %v1068
    %1202 = vmatprep.subr.mxu0 %v1077
    %1203 = vmatpush1.msra.mxu0 %v1076
    %1204 = vmatprep.subr.mxu0 %v1085
    %1205 = vmatpush1.msra.mxu0 %v1084
    %1206 = vmatprep.subr.mxu0 %v1113
    %1207 = vmatpush1.msra.mxu0 %v1110
    %1208 = vmatprep.subr.mxu0 0.0
    %1209 = vmatpush1.msra.mxu0 0.0
    %1210 = vmatprep.subr.mxu0 0.0
    %1211 = vmatpush1.msra.mxu0 0.0
    %1212 = vmatprep.subr.mxu0 0.0
    %1213 = vmatpush1.msra.mxu0 0.0
    %1214 = vmatprep.subr.mxu0 0.0
    %1215 = vmatpush1.msra.mxu0 0.0
    %1216 = vmatprep.subr.mxu0 0.0
    %1217 = vmatpush1.msra.mxu0 0.0
    %1218 = vmatprep.subr.mxu0 0.0
    %1219 = vmatpush1.msra.mxu0 0.0
    %1220 = vmatprep.subr.mxu0 0.0
    %1221 = vmatpush1.msra.mxu0 0.0
    %1222 = vmatprep.subr.mxu0 0.0
    %1223 = vmatpush1.msra.mxu0 0.0
    %1224 = vmatprep.subr.mxu0 0.0
    %1225 = vmatpush1.msra.mxu0 0.0
    %1226 = vmatprep.subr.mxu0 0.0
    %1227 = vmatpush1.msra.mxu0 0.0
    %1228 = vmatprep.subr.mxu0 0.0
    %1229 = vmatpush1.msra.mxu0 0.0
    %1230 = vmatprep.subr.mxu0 0.0
    %1231 = vmatpush1.msra.mxu0 0.0
    %1232 = vmatprep.subr.mxu0 0.0
    %1233 = vmatpush1.msra.mxu0 0.0
    %1234 = vmatprep.subr.mxu0 0.0
    %1235 = vmatpush1.msra.mxu0 0.0
    %1236 = vmatprep.subr.mxu0 0.0
    %1237 = vmatpush1.msra.mxu0 0.0
    %1238 = vmatprep.subr.mxu0 0.0
    %1239 = vmatpush1.msra.mxu0 0.0
    %1240 = vmatprep.subr.mxu0 0.0
    %1241 = vmatpush1.msra.mxu0 0.0
    %1242 = vmatprep.subr.mxu0 0.0
    %1243 = vmatpush1.msra.mxu0 0.0
    %1244 = vmatprep.subr.mxu0 0.0
    %1245 = vmatpush1.msra.mxu0 0.0
    %1246 = vmatprep.subr.mxu0 0.0
    %1247 = vmatpush1.msra.mxu0 0.0
    %1248 = vmatprep.subr.mxu0 0.0
    %1249 = vmatpush1.msra.mxu0 0.0
    %1250 = vmatprep.subr.mxu0 0.0
    %1251 = vmatpush1.msra.mxu0 0.0
    %1252 = vmatprep.subr.mxu0 0.0
    %1253 = vmatpush1.msra.mxu0 0.0
    %1254 = vmatprep.subr.mxu0 0.0
    %1255 = vmatpush1.msra.mxu0 0.0
    %1256 = vmatprep.subr.mxu0 0.0
    %1257 = vmatpush1.msra.mxu0 0.0
    %1258 = vmatprep.subr.mxu0 0.0
    %1259 = vmatpush1.msra.mxu0 0.0
    %1260 = vmatprep.subr.mxu0 0.0
    %1261 = vmatpush1.msra.mxu0 0.0
    %1262 = vmatprep.mubr.f32.mxu0 0.0
    %1263 = vmatmul.mubr.f32.gmra.mrb[0].mxu0 %v1101
    %v1264 = vpop.f32.mrb[0].mxu0
    %v1265 = vadd.f32 0.0, %v1264
    %v1266 = vpop.f32.mrb[0].mxu0
    %v1267 = vadd.f32 0.0, %v1266
    %1268 = vdwg.mxu0
    %1269 = vmatprep.subr.mxu0 %v1063
    %1270 = vmatpush1.msra.mxu0 %v1062
    %1271 = vmatprep.subr.mxu0 %v1071
    %1272 = vmatpush1.msra.mxu0 %v1070
    %1273 = vmatprep.subr.mxu0 %v1079
    %1274 = vmatpush1.msra.mxu0 %v1078
    %1275 = vmatprep.subr.mxu0 %v1087
    %1276 = vmatpush1.msra.mxu0 %v1086
    %1277 = vmatprep.subr.mxu0 %v1119
    %1278 = vmatpush1.msra.mxu0 %v1116
    %1279 = vmatprep.subr.mxu0 0.0
    %1280 = vmatpush1.msra.mxu0 0.0
    %1281 = vmatprep.subr.mxu0 0.0
    %1282 = vmatpush1.msra.mxu0 0.0
    %1283 = vmatprep.subr.mxu0 0.0
    %1284 = vmatpush1.msra.mxu0 0.0
    %1285 = vmatprep.subr.mxu0 0.0
    %1286 = vmatpush1.msra.mxu0 0.0
    %1287 = vmatprep.subr.mxu0 0.0
    %1288 = vmatpush1.msra.mxu0 0.0
    %1289 = vmatprep.subr.mxu0 0.0
    %1290 = vmatpush1.msra.mxu0 0.0
    %1291 = vmatprep.subr.mxu0 0.0
    %1292 = vmatpush1.msra.mxu0 0.0
    %1293 = vmatprep.subr.mxu0 0.0
    %1294 = vmatpush1.msra.mxu0 0.0
    %1295 = vmatprep.subr.mxu0 0.0
    %1296 = vmatpush1.msra.mxu0 0.0
    %1297 = vmatprep.subr.mxu0 0.0
    %1298 = vmatpush1.msra.mxu0 0.0
    %1299 = vmatprep.subr.mxu0 0.0
    %1300 = vmatpush1.msra.mxu0 0.0
    %1301 = vmatprep.subr.mxu0 0.0
    %1302 = vmatpush1.msra.mxu0 0.0
    %1303 = vmatprep.subr.mxu0 0.0
    %1304 = vmatpush1.msra.mxu0 0.0
    %1305 = vmatprep.subr.mxu0 0.0
    %1306 = vmatpush1.msra.mxu0 0.0
    %1307 = vmatprep.subr.mxu0 0.0
    %1308 = vmatpush1.msra.mxu0 0.0
    %1309 = vmatprep.subr.mxu0 0.0
    %1310 = vmatpush1.msra.mxu0 0.0
    %1311 = vmatprep.subr.mxu0 0.0
    %1312 = vmatpush1.msra.mxu0 0.0
    %1313 = vmatprep.subr.mxu0 0.0
    %1314 = vmatpush1.msra.mxu0 0.0
    %1315 = vmatprep.subr.mxu0 0.0
    %1316 = vmatpush1.msra.mxu0 0.0
    %1317 = vmatprep.subr.mxu0 0.0
    %1318 = vmatpush1.msra.mxu0 0.0
    %1319 = vmatprep.subr.mxu0 0.0
    %1320 = vmatpush1.msra.mxu0 0.0
    %1321 = vmatprep.subr.mxu0 0.0
    %1322 = vmatpush1.msra.mxu0 0.0
    %1323 = vmatprep.subr.mxu0 0.0
    %1324 = vmatpush1.msra.mxu0 0.0
    %1325 = vmatprep.subr.mxu0 0.0
    %1326 = vmatpush1.msra.mxu0 0.0
    %1327 = vmatprep.subr.mxu0 0.0
    %1328 = vmatpush1.msra.mxu0 0.0
    %1329 = vmatprep.subr.mxu0 0.0
    %1330 = vmatpush1.msra.mxu0 0.0
    %1331 = vmatprep.subr.mxu0 0.0
    %1332 = vmatpush1.msra.mxu0 0.0
    %1333 = vmatprep.mubr.f32.mxu0 0.0
    %1334 = vmatmul.mubr.f32.gmra.mrb[0].mxu0 %v1101
    %v1335 = vpop.f32.mrb[0].mxu0
    %v1336 = vadd.f32 0.0, %v1335
    %v1337 = vpop.f32.mrb[0].mxu0
    %v1338 = vadd.f32 0.0, %v1337
    %1339 = vdwg.mxu0
    %1340 = vmatprep.subr.mxu0 %v1065
    %1341 = vmatpush1.msra.mxu0 %v1064
    %1342 = vmatprep.subr.mxu0 %v1073
    %1343 = vmatpush1.msra.mxu0 %v1072
    %1344 = vmatprep.subr.mxu0 %v1081
    %1345 = vmatpush1.msra.mxu0 %v1080
    %1346 = vmatprep.subr.mxu0 %v1089
    %1347 = vmatpush1.msra.mxu0 %v1088
    %1348 = vmatprep.subr.mxu0 %v1125
    %1349 = vmatpush1.msra.mxu0 %v1122
    %1350 = vmatprep.subr.mxu0 0.0
    %1351 = vmatpush1.msra.mxu0 0.0
    %1352 = vmatprep.subr.mxu0 0.0
    %1353 = vmatpush1.msra.mxu0 0.0
    %1354 = vmatprep.subr.mxu0 0.0
    %1355 = vmatpush1.msra.mxu0 0.0
    %1356 = vmatprep.subr.mxu0 0.0
    %1357 = vmatpush1.msra.mxu0 0.0
    %1358 = vmatprep.subr.mxu0 0.0
    %1359 = vmatpush1.msra.mxu0 0.0
    %1360 = vmatprep.subr.mxu0 0.0
    %1361 = vmatpush1.msra.mxu0 0.0
    %1362 = vmatprep.subr.mxu0 0.0
    %1363 = vmatpush1.msra.mxu0 0.0
    %1364 = vmatprep.subr.mxu0 0.0
    %1365 = vmatpush1.msra.mxu0 0.0
    %1366 = vmatprep.subr.mxu0 0.0
    %1367 = vmatpush1.msra.mxu0 0.0
    %1368 = vmatprep.subr.mxu0 0.0
    %1369 = vmatpush1.msra.mxu0 0.0
    %1370 = vmatprep.subr.mxu0 0.0
    %1371 = vmatpush1.msra.mxu0 0.0
    %1372 = vmatprep.subr.mxu0 0.0
    %1373 = vmatpush1.msra.mxu0 0.0
    %1374 = vmatprep.subr.mxu0 0.0
    %1375 = vmatpush1.msra.mxu0 0.0
    %1376 = vmatprep.subr.mxu0 0.0
    %1377 = vmatpush1.msra.mxu0 0.0
    %1378 = vmatprep.subr.mxu0 0.0
    %1379 = vmatpush1.msra.mxu0 0.0
    %1380 = vmatprep.subr.mxu0 0.0
    %1381 = vmatpush1.msra.mxu0 0.0
    %1382 = vmatprep.subr.mxu0 0.0
    %1383 = vmatpush1.msra.mxu0 0.0
    %1384 = vmatprep.subr.mxu0 0.0
    %1385 = vmatpush1.msra.mxu0 0.0
    %1386 = vmatprep.subr.mxu0 0.0
    %1387 = vmatpush1.msra.mxu0 0.0
    %1388 = vmatprep.subr.mxu0 0.0
    %1389 = vmatpush1.msra.mxu0 0.0
    %1390 = vmatprep.subr.mxu0 0.0
    %1391 = vmatpush1.msra.mxu0 0.0
    %1392 = vmatprep.subr.mxu0 0.0
    %1393 = vmatpush1.msra.mxu0 0.0
    %1394 = vmatprep.subr.mxu0 0.0
    %1395 = vmatpush1.msra.mxu0 0.0
    %1396 = vmatprep.subr.mxu0 0.0
    %1397 = vmatpush1.msra.mxu0 0.0
    %1398 = vmatprep.subr.mxu0 0.0
    %1399 = vmatpush1.msra.mxu0 0.0
    %1400 = vmatprep.subr.mxu0 0.0
    %1401 = vmatpush1.msra.mxu0 0.0
    %1402 = vmatprep.subr.mxu0 0.0
    %1403 = vmatpush1.msra.mxu0 0.0
    %1404 = vmatprep.mubr.f32.mxu0 0.0
    %1405 = vmatmul.mubr.f32.gmra.mrb[0].mxu0 %v1101
    %v1406 = vpop.f32.mrb[0].mxu0
    %v1407 = vadd.f32 0.0, %v1406
    %v1408 = vpop.f32.mrb[0].mxu0
    %v1409 = vadd.f32 0.0, %v1408
    %1410 = vdwg.mxu0
    %v1419 = vcombine.low %v1194, %v1196
    %v1420 = vcombine.low %v1265, %v1267
    %v1421 = vcombine.low %v1336, %v1338
    %v1422 = vcombine.low %v1407, %v1409
    %v1424 = vunpack.c.l.s4 1966171168
    %v1425 = vunpack.c.0.s8 %v1424
    %v1426 = vlaneseq
    %v1427 = vshrl.u32 %v1426, 7
    %v1428 = vsub.s32 %v1425, %v1427
    %v1429 = vrot.slane %v1419, %v1428
    %v1431 = vunpack.c.l.s4 1966171168
    %v1432 = vunpack.c.0.s8 %v1431
    %v1433 = vlaneseq
    %v1434 = vshrl.u32 %v1433, 7
    %v1435 = vsub.s32 %v1432, %v1434
    %v1436 = vrot.slane %v1420, %v1435
    %v1438 = vunpack.c.l.s4 1966171168
    %v1439 = vunpack.c.0.s8 %v1438
    %v1440 = vlaneseq
    %v1441 = vshrl.u32 %v1440, 7
    %v1442 = vsub.s32 %v1439, %v1441
    %v1443 = vrot.slane %v1421, %v1442
    %v1445 = vunpack.c.l.s4 1966171168
    %v1446 = vunpack.c.0.s8 %v1445
    %v1447 = vlaneseq
    %v1448 = vshrl.u32 %v1447, 7
    %v1449 = vsub.s32 %v1446, %v1448
    %v1450 = vrot.slane %v1422, %v1449
    %v1451 = vcombine.low %v1429, %v1436
    %v1452 = vcombine.low %v1443, %v1450
    %v1454 = vunpack.c.l.s4 1966171168
    %v1455 = vunpack.c.0.s8 %v1454
    %v1456 = vlaneseq
    %v1457 = vshrl.u32 %v1456, 7
    %v1458 = vsub.s32 %v1455, %v1457
    %v1459 = vrot.slane %v1451, %v1458
    %v1461 = vunpack.c.l.s4 1966171168
    %v1462 = vunpack.c.0.s8 %v1461
    %v1463 = vlaneseq
    %v1464 = vshrl.u32 %v1463, 7
    %v1465 = vsub.s32 %v1462, %v1464
    %v1466 = vrot.slane %v1452, %v1465
    %v1467 = vcombine.low %v1459, %v1466
    %1469 = vst [vmem:[#allocation2] sm:$0xff] %v1467
    // Predicated region
    $region18: #{tpu_custom_call.1} parent=1 // pred_check
      _
    $region19: #{tpu_custom_call.1} parent=1 // pred_check_branch
      %1471 = sbr.rel (0) target = $region21
    $region20: #{tpu_custom_call.1} parent=1 // pred_region
      %s1473 = ssub.s32 128, 128
      %1474 = vsyncadd [#allocation3], %s1473
      %s1476 = sshll.u32 [#allocation2], 4
      %s1477 = int_to_ptr.vmem [resolvable:$true] %s1476
      %1479 = dma.vmem_to_hbm [thread:$0]  %s1477, 128, %s4, [#allocation3]
    $region21: #{tpu_custom_call.1} parent=1 // pred_fallthru
      _
    // Predicated region
    $region22: #{tpu_custom_call.1} parent=1 // pred_check
      _
    $region23: #{tpu_custom_call.1} parent=1 // pred_check_branch
      %1481 = sbr.rel (0) target = $region25
    $region24: #{tpu_custom_call.1} parent=1 // pred_region
      %1482 = dma.done [#allocation3], 128
    $region25: #{tpu_custom_call.1} parent=1 // pred_fallthru
      _
    %1483 = vsyncpa [#allocation3], 1

</llo_original>
